<compile_context>
chip_gen: v5e
topology: v5e:2x2
jax: 0.10.0
libtpu: 0.0.40
codegen_flags: <defaults>
</compile_context>

<pallas_src>
import functools

import jax
import jax.numpy as jnp
from jax.experimental import pallas as pl
from jax.experimental.pallas import tpu as pltpu


# --------------------------------------------------------------------------
# Kernel
# --------------------------------------------------------------------------
def _make_res_kernel(half_rows):
    """Build the fused residual-block kernel.

    half_rows: rows per independent sub-chain (None -> single chain).  When
    set, the tile is processed as two independent dependence chains so the
    LLO scheduler can overlap one half's VPU phases with the other's matmuls.
    """

    def kernel(x_ref,
               w_t, w_b, u1_t, u1_b, v1_t, v1_b, u2_t, u2_b, v2_t, v2_b,
               o_ref):
        def linear(inp_bf16, wt_ref, b_ref):
            # MXU matmul (bf16 operands, f32 accumulation) + f32 bias add.
            return (jnp.dot(inp_bf16, wt_ref[...],
                            preferred_element_type=jnp.float32) + b_ref[...])

        def chain(x_bf16):
            # h = w(x)
            h = linear(x_bf16, w_t, w_b)                       # f32
            hb = h.astype(jnp.bfloat16)
            # h = h + relu(v1(relu(u1(h))))
            t = jnp.maximum(linear(hb, u1_t, u1_b), 0.0).astype(jnp.bfloat16)
            t = jnp.maximum(linear(t, v1_t, v1_b), 0.0)        # f32
            h = h + t
            hb = h.astype(jnp.bfloat16)
            # out = h + relu(v2(relu(u2(h))))
            t = jnp.maximum(linear(hb, u2_t, u2_b), 0.0).astype(jnp.bfloat16)
            t = jnp.maximum(linear(t, v2_t, v2_b), 0.0)        # f32
            return h + t

        if half_rows is None:
            o_ref[...] = chain(x_ref[...]).astype(o_ref.dtype)
        else:
            # Two independent chains -> MXU/VPU overlap within the tile.
            o_ref[:half_rows, :] = chain(x_ref[:half_rows, :]).astype(o_ref.dtype)
            o_ref[half_rows:, :] = chain(x_ref[half_rows:, :]).astype(o_ref.dtype)

    return kernel


# --------------------------------------------------------------------------
# Host-side planning / wrappers
# --------------------------------------------------------------------------
def _round_up(a, m):
    return ((a + m - 1) // m) * m


def _vmem_capacity_bytes():
    """Generation-aware VMEM capacity; conservative fallback if query fails."""
    try:
        return int(pltpu.get_tpu_info().vmem_capacity_bytes)
    except Exception:
        return 64 << 20  # v7x per-TensorCore VMEM (smallest current chip)


def prepare_res_params(params, H):
    """Pad / transpose / bf16-cast the five Linear layers ONCE.

    Hoisted out of the jitted forward so repeated calls don't re-pay the
    5*H^2 read+transpose+cast (which otherwise competes with the activation
    stream for HBM bandwidth).
    """
    Hp = _round_up(max(H, 128), 128)

    def wt_b(name):
        W, b = params[name]                      # PyTorch layout: W (H, H), b (H,)
        Wt = jnp.pad(jnp.asarray(W, jnp.float32).T,
                     ((0, Hp - H), (0, Hp - H))).astype(jnp.bfloat16)
        bp = jnp.pad(jnp.asarray(b, jnp.float32), (0, Hp - H)).reshape(1, Hp)
        return Wt, bp

    return tuple(wt_b(n) for n in ("w", "u1", "v1", "u2", "v2"))


@functools.partial(jax.jit, static_argnames=("tn",))
def res_forward(x, prepped, *, tn=None):
    """x: (N, H) float32.  prepped: output of prepare_res_params."""
    N, H = x.shape
    Hp = prepped[0][0].shape[0]
    assert Hp % 128 == 0 and Hp >= H

    vmem_cap = _vmem_capacity_bytes()
    # Resident (single-buffered) bf16 weights + f32 biases.
    resident_bytes = 5 * Hp * Hp * 2 + 5 * Hp * 4

    # --- row tile -----------------------------------------------------------
    if tn is None:
        # Per-row VMEM: in (bf16, 2 bufs) + out (f32, 2 bufs) + ~6 f32 temps.
        per_row = Hp * (2 * 2 + 2 * 4 + 6 * 4)
        avail = vmem_cap - resident_bytes - (8 << 20)
        tn_cap = max(8, (avail // per_row) // 8 * 8) if avail > 8 * per_row else 8
        default = 512 if vmem_cap >= (100 << 20) else 256   # 128-MiB chips vs v7x
        tn = max(8, min(default, tn_cap, _round_up(N, 8)))
    assert tn % 8 == 0, "row tile must be a multiple of 8 sublanes"

    Np = _round_up(N, tn)
    x_p = jnp.pad(x, ((0, Np - N), (0, Hp - H))).astype(jnp.bfloat16)

    # --- specs ---------------------------------------------------------------
    # Constant index_map -> single buffer (no point double-buffering weights).
    mat_spec = pl.BlockSpec((Hp, Hp), lambda i: (0, 0),
                            pipeline_mode=pl.Buffered(1))
    bias_spec = pl.BlockSpec((1, Hp), lambda i: (0, 0),
                             pipeline_mode=pl.Buffered(1))
    in_spec = pl.BlockSpec((tn, Hp), lambda i: (i, 0))
    out_spec = pl.BlockSpec((tn, Hp), lambda i: (i, 0))

    # --- VMEM budget (weights + act I/O buffers + in-kernel temporaries) -----
    io_bytes = 2 * tn * Hp * 2 + 2 * tn * Hp * 4     # bf16 in + f32 out, 2 bufs each
    tmp_bytes = 6 * tn * Hp * 4                      # h, t, bf16 copies, store staging
    vmem_limit = min(
        vmem_cap - (4 << 20),
        max(32 << 20, resident_bytes + io_bytes + tmp_bytes + (8 << 20)),
    )

    cost = pl.CostEstimate(
        flops=2 * 5 * Np * Hp * Hp,
        transcendentals=0,
        bytes_accessed=Np * Hp * 2 + Np * Hp * 4 + 5 * Hp * Hp * 2 + 5 * Hp * 4,
    )

    half = tn // 2 if (tn >= 16 and tn % 16 == 0) else None
    kernel = _make_res_kernel(half)

    flat_params = []
    for Wt, bp in prepped:
        flat_params += [Wt, bp]

    out_p = pl.pallas_call(
        kernel,
        out_shape=jax.ShapeDtypeStruct((Np, Hp), x.dtype),
        grid_spec=pltpu.PrefetchScalarGridSpec(
            num_scalar_prefetch=0,
            grid=(Np // tn,),
            in_specs=[in_spec] + [mat_spec, bias_spec] * 5,
            out_specs=out_spec,
        ),
        compiler_params=pltpu.CompilerParams(
            # Row axis is independent work; on v7x consider CORE_PARALLEL /
            # core_map to guarantee the split across both TensorCores.
            dimension_semantics=("parallel",),
            vmem_limit_bytes=int(vmem_limit)),
        cost_estimate=cost,
    )(x_p, *flat_params)

    return out_p[:N, :H]


# --------------------------------------------------------------------------
# Reference + test harness
# --------------------------------------------------------------------------
def _init_linear(key, H):
    """Deterministic init mimicking nn.Linear's uniform(-1/sqrt(H), 1/sqrt(H))."""
    kw, kb = jax.random.split(key)
    bound = 1.0 / jnp.sqrt(jnp.float32(H))
    W = jax.random.uniform(kw, (H, H), jnp.float32, -bound, bound)
    b = jax.random.uniform(kb, (H,), jnp.float32, -bound, bound)
    return W, b


def _ref_forward(x, params):
    """Pure-JAX f32 reference identical to the PyTorch forward."""
    def lin(inp, name):
        W, b = params[name]
        return inp @ W.T + b
    h = lin(x, "w")
    h = h + jax.nn.relu(lin(jax.nn.relu(lin(h, "u1")), "v1"))
    return h + jax.nn.relu(lin(jax.nn.relu(lin(h, "u2")), "v2"))


if __name__ == "__main__":
    H = 32   # hidden size
    N = 8    # number of rows (e.g. batch * seq)

    key = jax.random.PRNGKey(0)
    kx, kw, ku1, kv1, ku2, kv2 = jax.random.split(key, 6)

    x = jax.random.normal(kx, (N, H), jnp.float32)
    params = {
        "w":  _init_linear(kw,  H),
        "u1": _init_linear(ku1, H),
        "v1": _init_linear(kv1, H),
        "u2": _init_linear(ku2, H),
        "v2": _init_linear(kv2, H),
    }

    # Weight preprocessing is done once, outside the forward.
    prepped = prepare_res_params(params, H)

    out = res_forward(x, prepped)
    out = jax.block_until_ready(out)

    ref = _ref_forward(x, params)
    assert out.shape == (N, H) and out.dtype == jnp.float32
    # bf16 MXU operands -> relaxed tolerance vs. the pure-f32 reference.
    assert jnp.allclose(out, ref, atol=5e-2, rtol=5e-2), (
        float(jnp.max(jnp.abs(out - ref))))

    print("KERNEL_OK")
</pallas_src>

<mosaic_0001>
module attributes {stable_mosaic.version = 11 : i64} {
  func.func @kernel(%arg0: i32, %arg1: memref<8x128xbf16, #tpu.memory_space<vmem>>, %arg2: memref<128x128xbf16, #tpu.memory_space<vmem>>, %arg3: memref<1x128xf32, #tpu.memory_space<vmem>>, %arg4: memref<128x128xbf16, #tpu.memory_space<vmem>>, %arg5: memref<1x128xf32, #tpu.memory_space<vmem>>, %arg6: memref<128x128xbf16, #tpu.memory_space<vmem>>, %arg7: memref<1x128xf32, #tpu.memory_space<vmem>>, %arg8: memref<128x128xbf16, #tpu.memory_space<vmem>>, %arg9: memref<1x128xf32, #tpu.memory_space<vmem>>, %arg10: memref<128x128xbf16, #tpu.memory_space<vmem>>, %arg11: memref<1x128xf32, #tpu.memory_space<vmem>>, %arg12: memref<8x128xf32, #tpu.memory_space<vmem>>) attributes {dimension_semantics = [#tpu.dimension_semantics<parallel>], iteration_bounds = array<i64: 1>, scalar_prefetch = 0 : i64, scratch_operands = 0 : i64, tpu.core_type = #tpu.core_type<tc>, window_params = [{transform_indices = @transform_0, window_bounds = array<i64: 8, 128>}, {pipeline_mode = #tpu.pipeline_mode<synchronous>, transform_indices = @transform_1, window_bounds = array<i64: 128, 128>}, {pipeline_mode = #tpu.pipeline_mode<synchronous>, transform_indices = @transform_2, window_bounds = array<i64: 1, 128>}, {pipeline_mode = #tpu.pipeline_mode<synchronous>, transform_indices = @transform_3, window_bounds = array<i64: 128, 128>}, {pipeline_mode = #tpu.pipeline_mode<synchronous>, transform_indices = @transform_4, window_bounds = array<i64: 1, 128>}, {pipeline_mode = #tpu.pipeline_mode<synchronous>, transform_indices = @transform_5, window_bounds = array<i64: 128, 128>}, {pipeline_mode = #tpu.pipeline_mode<synchronous>, transform_indices = @transform_6, window_bounds = array<i64: 1, 128>}, {pipeline_mode = #tpu.pipeline_mode<synchronous>, transform_indices = @transform_7, window_bounds = array<i64: 128, 128>}, {pipeline_mode = #tpu.pipeline_mode<synchronous>, transform_indices = @transform_8, window_bounds = array<i64: 1, 128>}, {pipeline_mode = #tpu.pipeline_mode<synchronous>, transform_indices = @transform_9, window_bounds = array<i64: 128, 128>}, {pipeline_mode = #tpu.pipeline_mode<synchronous>, transform_indices = @transform_10, window_bounds = array<i64: 1, 128>}, {transform_indices = @transform_11, window_bounds = array<i64: 8, 128>}]} {
    %c0 = arith.constant 0 : index
    %c0_0 = arith.constant 0 : index
    %0 = vector.load %arg1[%c0, %c0_0] : memref<8x128xbf16, #tpu.memory_space<vmem>>, vector<8x128xbf16>
    %c0_1 = arith.constant 0 : index
    %c0_2 = arith.constant 0 : index
    %1 = vector.load %arg2[%c0_1, %c0_2] : memref<128x128xbf16, #tpu.memory_space<vmem>>, vector<128x128xbf16>
    %cst = arith.constant dense<0.000000e+00> : vector<8x128xf32>
    %2 = tpu.matmul %0, %1, %cst {dimension_numbers = #tpu.dot_dimension_numbers<[1], [0], [0], [1], [0, 0, 1, 1], [], []>} : vector<8x128xbf16>, vector<128x128xbf16>, vector<8x128xf32> -> vector<8x128xf32>
    %c0_3 = arith.constant 0 : index
    %c0_4 = arith.constant 0 : index
    %3 = vector.load %arg3[%c0_3, %c0_4] : memref<1x128xf32, #tpu.memory_space<vmem>>, vector<1x128xf32>
    %4 = vector.broadcast %3 : vector<1x128xf32> to vector<8x128xf32>
    %5 = arith.addf %2, %4 : vector<8x128xf32>
    %6 = arith.truncf %5 : vector<8x128xf32> to vector<8x128xbf16>
    %c0_5 = arith.constant 0 : index
    %c0_6 = arith.constant 0 : index
    %7 = vector.load %arg4[%c0_5, %c0_6] : memref<128x128xbf16, #tpu.memory_space<vmem>>, vector<128x128xbf16>
    %cst_7 = arith.constant dense<0.000000e+00> : vector<8x128xf32>
    %8 = tpu.matmul %6, %7, %cst_7 {dimension_numbers = #tpu.dot_dimension_numbers<[1], [0], [0], [1], [0, 0, 1, 1], [], []>} : vector<8x128xbf16>, vector<128x128xbf16>, vector<8x128xf32> -> vector<8x128xf32>
    %c0_8 = arith.constant 0 : index
    %c0_9 = arith.constant 0 : index
    %9 = vector.load %arg5[%c0_8, %c0_9] : memref<1x128xf32, #tpu.memory_space<vmem>>, vector<1x128xf32>
    %10 = vector.broadcast %9 : vector<1x128xf32> to vector<8x128xf32>
    %11 = arith.addf %8, %10 : vector<8x128xf32>
    %cst_10 = arith.constant 0.000000e+00 : f32
    %12 = vector.broadcast %cst_10 : f32 to vector<8x128xf32>
    %13 = arith.maximumf %11, %12 : vector<8x128xf32>
    %14 = arith.truncf %13 : vector<8x128xf32> to vector<8x128xbf16>
    %c0_11 = arith.constant 0 : index
    %c0_12 = arith.constant 0 : index
    %15 = vector.load %arg6[%c0_11, %c0_12] : memref<128x128xbf16, #tpu.memory_space<vmem>>, vector<128x128xbf16>
    %cst_13 = arith.constant dense<0.000000e+00> : vector<8x128xf32>
    %16 = tpu.matmul %14, %15, %cst_13 {dimension_numbers = #tpu.dot_dimension_numbers<[1], [0], [0], [1], [0, 0, 1, 1], [], []>} : vector<8x128xbf16>, vector<128x128xbf16>, vector<8x128xf32> -> vector<8x128xf32>
    %c0_14 = arith.constant 0 : index
    %c0_15 = arith.constant 0 : index
    %17 = vector.load %arg7[%c0_14, %c0_15] : memref<1x128xf32, #tpu.memory_space<vmem>>, vector<1x128xf32>
    %18 = vector.broadcast %17 : vector<1x128xf32> to vector<8x128xf32>
    %19 = arith.addf %16, %18 : vector<8x128xf32>
    %cst_16 = arith.constant 0.000000e+00 : f32
    %20 = vector.broadcast %cst_16 : f32 to vector<8x128xf32>
    %21 = arith.maximumf %19, %20 : vector<8x128xf32>
    %22 = arith.addf %5, %21 : vector<8x128xf32>
    %23 = arith.truncf %22 : vector<8x128xf32> to vector<8x128xbf16>
    %c0_17 = arith.constant 0 : index
    %c0_18 = arith.constant 0 : index
    %24 = vector.load %arg8[%c0_17, %c0_18] : memref<128x128xbf16, #tpu.memory_space<vmem>>, vector<128x128xbf16>
    %cst_19 = arith.constant dense<0.000000e+00> : vector<8x128xf32>
    %25 = tpu.matmul %23, %24, %cst_19 {dimension_numbers = #tpu.dot_dimension_numbers<[1], [0], [0], [1], [0, 0, 1, 1], [], []>} : vector<8x128xbf16>, vector<128x128xbf16>, vector<8x128xf32> -> vector<8x128xf32>
    %c0_20 = arith.constant 0 : index
    %c0_21 = arith.constant 0 : index
    %26 = vector.load %arg9[%c0_20, %c0_21] : memref<1x128xf32, #tpu.memory_space<vmem>>, vector<1x128xf32>
    %27 = vector.broadcast %26 : vector<1x128xf32> to vector<8x128xf32>
    %28 = arith.addf %25, %27 : vector<8x128xf32>
    %cst_22 = arith.constant 0.000000e+00 : f32
    %29 = vector.broadcast %cst_22 : f32 to vector<8x128xf32>
    %30 = arith.maximumf %28, %29 : vector<8x128xf32>
    %31 = arith.truncf %30 : vector<8x128xf32> to vector<8x128xbf16>
    %c0_23 = arith.constant 0 : index
    %c0_24 = arith.constant 0 : index
    %32 = vector.load %arg10[%c0_23, %c0_24] : memref<128x128xbf16, #tpu.memory_space<vmem>>, vector<128x128xbf16>
    %cst_25 = arith.constant dense<0.000000e+00> : vector<8x128xf32>
    %33 = tpu.matmul %31, %32, %cst_25 {dimension_numbers = #tpu.dot_dimension_numbers<[1], [0], [0], [1], [0, 0, 1, 1], [], []>} : vector<8x128xbf16>, vector<128x128xbf16>, vector<8x128xf32> -> vector<8x128xf32>
    %c0_26 = arith.constant 0 : index
    %c0_27 = arith.constant 0 : index
    %34 = vector.load %arg11[%c0_26, %c0_27] : memref<1x128xf32, #tpu.memory_space<vmem>>, vector<1x128xf32>
    %35 = vector.broadcast %34 : vector<1x128xf32> to vector<8x128xf32>
    %36 = arith.addf %33, %35 : vector<8x128xf32>
    %cst_28 = arith.constant 0.000000e+00 : f32
    %37 = vector.broadcast %cst_28 : f32 to vector<8x128xf32>
    %38 = arith.maximumf %36, %37 : vector<8x128xf32>
    %39 = arith.addf %22, %38 : vector<8x128xf32>
    %c0_29 = arith.constant 0 : index
    %c0_30 = arith.constant 0 : index
    %40 = vector.load %arg12[%c0_29, %c0_30] : memref<8x128xf32, #tpu.memory_space<vmem>>, vector<8x128xf32>
    tpu.vector_store %arg12[%c0_29, %c0_30], %39 {strides = array<i32>} : memref<8x128xf32, #tpu.memory_space<vmem>>, vector<8x128xf32>,
    return
  }
  func.func @transform_0(%arg0: i32) -> (i32, i32) {
    %c0_i32 = arith.constant 0 : i32
    %c0_i32_0 = arith.constant 0 : i32
    return %arg0, %c0_i32 : i32, i32
  }
  func.func @transform_1(%arg0: i32) -> (i32, i32) {
    %c0_i32 = arith.constant 0 : i32
    %c0_i32_0 = arith.constant 0 : i32
    %c0_i32_1 = arith.constant 0 : i32
    return %c0_i32, %c0_i32_0 : i32, i32
  }
  func.func @transform_2(%arg0: i32) -> (i32, i32) {
    %c0_i32 = arith.constant 0 : i32
    %c0_i32_0 = arith.constant 0 : i32
    %c0_i32_1 = arith.constant 0 : i32
    return %c0_i32, %c0_i32_0 : i32, i32
  }
  func.func @transform_3(%arg0: i32) -> (i32, i32) {
    %c0_i32 = arith.constant 0 : i32
    %c0_i32_0 = arith.constant 0 : i32
    %c0_i32_1 = arith.constant 0 : i32
    return %c0_i32, %c0_i32_0 : i32, i32
  }
  func.func @transform_4(%arg0: i32) -> (i32, i32) {
    %c0_i32 = arith.constant 0 : i32
    %c0_i32_0 = arith.constant 0 : i32
    %c0_i32_1 = arith.constant 0 : i32
    return %c0_i32, %c0_i32_0 : i32, i32
  }
  func.func @transform_5(%arg0: i32) -> (i32, i32) {
    %c0_i32 = arith.constant 0 : i32
    %c0_i32_0 = arith.constant 0 : i32
    %c0_i32_1 = arith.constant 0 : i32
    return %c0_i32, %c0_i32_0 : i32, i32
  }
  func.func @transform_6(%arg0: i32) -> (i32, i32) {
    %c0_i32 = arith.constant 0 : i32
    %c0_i32_0 = arith.constant 0 : i32
    %c0_i32_1 = arith.constant 0 : i32
    return %c0_i32, %c0_i32_0 : i32, i32
  }
  func.func @transform_7(%arg0: i32) -> (i32, i32) {
    %c0_i32 = arith.constant 0 : i32
    %c0_i32_0 = arith.constant 0 : i32
    %c0_i32_1 = arith.constant 0 : i32
    return %c0_i32, %c0_i32_0 : i32, i32
  }
  func.func @transform_8(%arg0: i32) -> (i32, i32) {
    %c0_i32 = arith.constant 0 : i32
    %c0_i32_0 = arith.constant 0 : i32
    %c0_i32_1 = arith.constant 0 : i32
    return %c0_i32, %c0_i32_0 : i32, i32
  }
  func.func @transform_9(%arg0: i32) -> (i32, i32) {
    %c0_i32 = arith.constant 0 : i32
    %c0_i32_0 = arith.constant 0 : i32
    %c0_i32_1 = arith.constant 0 : i32
    return %c0_i32, %c0_i32_0 : i32, i32
  }
  func.func @transform_10(%arg0: i32) -> (i32, i32) {
    %c0_i32 = arith.constant 0 : i32
    %c0_i32_0 = arith.constant 0 : i32
    %c0_i32_1 = arith.constant 0 : i32
    return %c0_i32, %c0_i32_0 : i32, i32
  }
  func.func @transform_11(%arg0: i32) -> (i32, i32) {
    %c0_i32 = arith.constant 0 : i32
    %c0_i32_0 = arith.constant 0 : i32
    return %arg0, %c0_i32 : i32, i32
  }
}

</mosaic_0001>

<llo_original>
// kernel: res_forward.1
$region0: #{res_forward.1}
  #allocation0 [shape = 'u32[]', space=smem, size = 0x4, offset = 0x4, fixed_abs, tag = 'smem constant byte address 0x4 - core index']
  #allocation1 [shape = 'u32[72,128]{1,0:T(1,128)}', space=vmem, size = 0x9000, scoped, tag = 'internal scratch']
  %s0 = inlined_call_operand.vmem [shape: bf16[8,128], index: 0, kind: input, shape index: {}]
  %s1 = inlined_call_operand.hbm [shape: bf16[128,128], index: 1, kind: input, shape index: {}]
  %s2 = inlined_call_operand.vmem [shape: f32[1,128], index: 2, kind: input, shape index: {}]
  %s3 = inlined_call_operand.hbm [shape: bf16[128,128], index: 3, kind: input, shape index: {}]
  %s4 = inlined_call_operand.vmem [shape: f32[1,128], index: 4, kind: input, shape index: {}]
  %s5 = inlined_call_operand.hbm [shape: bf16[128,128], index: 5, kind: input, shape index: {}]
  %s6 = inlined_call_operand.vmem [shape: f32[1,128], index: 6, kind: input, shape index: {}]
  %s7 = inlined_call_operand.hbm [shape: bf16[128,128], index: 7, kind: input, shape index: {}]
  %s8 = inlined_call_operand.vmem [shape: f32[1,128], index: 8, kind: input, shape index: {}]
  %s9 = inlined_call_operand.hbm [shape: bf16[128,128], index: 9, kind: input, shape index: {}]
  %s10 = inlined_call_operand.vmem [shape: f32[1,128], index: 10, kind: input, shape index: {}]
  %s11 = inlined_call_operand.hbm [shape: f32[8,128], index: 11, kind: output, shape index: {}]
  %s12 = sld [smem:[#allocation0]]
  $region74: #{res_forward.1} parent=0
    _
  %s14 = ssub.s32 1, %s12
  %s15 = scalar_select 0, %s14, %s12
  $region1: #{res_forward.1} parent=0
    #allocation2 [shape = 'u8[32768]{0}', space=vmem, size = 0x8000, scoped, tag = 'input window, operand 1, single buffered']
    #allocation3 [shape = 's32[1]{0}', space=sflag, size = 0x4, scoped, tag = 'scoped memory for res_forward.1']
    #allocation4 [shape = 's32[1]{0}', space=sflag, size = 0x4, scoped, tag = 'scoped memory for res_forward.1']
    #allocation5 [shape = 'u8[32768]{0}', space=vmem, size = 0x8000, scoped, tag = 'input window, operand 3, single buffered']
    #allocation6 [shape = 's32[1]{0}', space=sflag, size = 0x4, scoped, tag = 'scoped memory for res_forward.1']
    #allocation7 [shape = 'u8[32768]{0}', space=vmem, size = 0x8000, scoped, tag = 'input window, operand 5, single buffered']
    #allocation8 [shape = 'u8[32768]{0}', space=vmem, size = 0x8000, scoped, tag = 'input window, operand 7, single buffered']
    #allocation9 [shape = 's32[1]{0}', space=sflag, size = 0x4, scoped, tag = 'scoped memory for res_forward.1']
    #allocation10 [shape = 'u8[32768]{0}', space=vmem, size = 0x8000, scoped, tag = 'input window, operand 9, single buffered']
    #allocation11 [shape = 'u8[4096]{0}', space=vmem, size = 0x1000, scoped, tag = 'output window, operand 0, single buffered']
    %16 = vsyncpa [#allocation3], 0
    %17 = vsyncpa [#allocation6], 0
    %18 = vsyncpa [#allocation9], 0
    %19 = vsyncpa [#allocation4], 0
    // Predicated region
    $region2: #{res_forward.1} parent=1 // pred_check
      _
    $region3: #{res_forward.1} parent=1 // pred_check_branch
      %21 = sbr.rel (0) target = $region5
    $region4: #{res_forward.1} parent=1 // pred_region
      _
    $region5: #{res_forward.1} parent=1 // pred_fallthru
      _
    // Predicated region
    $region6: #{res_forward.1} parent=1 // pred_check
      _
    $region7: #{res_forward.1} parent=1 // pred_check_branch
      %23 = sbr.rel (0) target = $region9
    $region8: #{res_forward.1} parent=1 // pred_region
      %25 = vsyncadd [#allocation3], 0
      %s26 = sshll.u32 %s1, 4
      %s27 = int_to_ptr.hbm [resolvable:$true] %s26
      %s28 = sshll.u32 [#allocation2], 4
      %s29 = int_to_ptr.vmem [resolvable:$true] %s28
      %34 = dma.hbm_to_vmem [thread:$0]  %s27, 1024, %s29, [#allocation3], 64, 64, 4
    $region9: #{res_forward.1} parent=1 // pred_fallthru
      _
    // Predicated region
    $region10: #{res_forward.1} parent=1 // pred_check
      _
    $region11: #{res_forward.1} parent=1 // pred_check_branch
      %36 = sbr.rel (0) target = $region13
    $region12: #{res_forward.1} parent=1 // pred_region
      _
    $region13: #{res_forward.1} parent=1 // pred_fallthru
      _
    // Predicated region
    $region14: #{res_forward.1} parent=1 // pred_check
      _
    $region15: #{res_forward.1} parent=1 // pred_check_branch
      %38 = sbr.rel (0) target = $region17
    $region16: #{res_forward.1} parent=1 // pred_region
      %40 = vsyncadd [#allocation6], 0
      %s41 = sshll.u32 %s3, 4
      %s42 = int_to_ptr.hbm [resolvable:$true] %s41
      %s43 = sshll.u32 [#allocation5], 4
      %s44 = int_to_ptr.vmem [resolvable:$true] %s43
      %49 = dma.hbm_to_vmem [thread:$0]  %s42, 1024, %s44, [#allocation6], 64, 64, 4
    $region17: #{res_forward.1} parent=1 // pred_fallthru
      _
    // Predicated region
    $region18: #{res_forward.1} parent=1 // pred_check
      _
    $region19: #{res_forward.1} parent=1 // pred_check_branch
      %51 = sbr.rel (0) target = $region21
    $region20: #{res_forward.1} parent=1 // pred_region
      _
    $region21: #{res_forward.1} parent=1 // pred_fallthru
      _
    // Predicated region
    $region22: #{res_forward.1} parent=1 // pred_check
      _
    $region23: #{res_forward.1} parent=1 // pred_check_branch
      %53 = sbr.rel (0) target = $region25
    $region24: #{res_forward.1} parent=1 // pred_region
      %55 = vsyncadd [#allocation6], 0
      %s56 = sshll.u32 %s5, 4
      %s57 = int_to_ptr.hbm [resolvable:$true] %s56
      %s58 = sshll.u32 [#allocation7], 4
      %s59 = int_to_ptr.vmem [resolvable:$true] %s58
      %64 = dma.hbm_to_vmem [thread:$0]  %s57, 1024, %s59, [#allocation6], 64, 64, 4
    $region25: #{res_forward.1} parent=1 // pred_fallthru
      _
    // Predicated region
    $region26: #{res_forward.1} parent=1 // pred_check
      _
    $region27: #{res_forward.1} parent=1 // pred_check_branch
      %66 = sbr.rel (0) target = $region29
    $region28: #{res_forward.1} parent=1 // pred_region
      _
    $region29: #{res_forward.1} parent=1 // pred_fallthru
      _
    // Predicated region
    $region30: #{res_forward.1} parent=1 // pred_check
      _
    $region31: #{res_forward.1} parent=1 // pred_check_branch
      %68 = sbr.rel (0) target = $region33
    $region32: #{res_forward.1} parent=1 // pred_region
      %70 = vsyncadd [#allocation9], 0
      %s71 = sshll.u32 %s7, 4
      %s72 = int_to_ptr.hbm [resolvable:$true] %s71
      %s73 = sshll.u32 [#allocation8], 4
      %s74 = int_to_ptr.vmem [resolvable:$true] %s73
      %79 = dma.hbm_to_vmem [thread:$0]  %s72, 1024, %s74, [#allocation9], 64, 64, 4
    $region33: #{res_forward.1} parent=1 // pred_fallthru
      _
    // Predicated region
    $region34: #{res_forward.1} parent=1 // pred_check
      _
    $region35: #{res_forward.1} parent=1 // pred_check_branch
      %81 = sbr.rel (0) target = $region37
    $region36: #{res_forward.1} parent=1 // pred_region
      _
    $region37: #{res_forward.1} parent=1 // pred_fallthru
      _
    // Predicated region
    $region38: #{res_forward.1} parent=1 // pred_check
      _
    $region39: #{res_forward.1} parent=1 // pred_check_branch
      %83 = sbr.rel (0) target = $region41
    $region40: #{res_forward.1} parent=1 // pred_region
      %85 = vsyncadd [#allocation9], 0
      %s86 = sshll.u32 %s9, 4
      %s87 = int_to_ptr.hbm [resolvable:$true] %s86
      %s88 = sshll.u32 [#allocation10], 4
      %s89 = int_to_ptr.vmem [resolvable:$true] %s88
      %94 = dma.hbm_to_vmem [thread:$0]  %s87, 1024, %s89, [#allocation9], 64, 64, 4
    $region41: #{res_forward.1} parent=1 // pred_fallthru
      _
    // Predicated region
    $region42: #{res_forward.1} parent=1 // pred_check
      _
    $region43: #{res_forward.1} parent=1 // pred_check_branch
      %96 = sbr.rel (0) target = $region45
    $region44: #{res_forward.1} parent=1 // pred_region
      _
    $region45: #{res_forward.1} parent=1 // pred_fallthru
      _
    // Predicated region
    $region46: #{res_forward.1} parent=1 // pred_check
      _
    $region47: #{res_forward.1} parent=1 // pred_check_branch
      %98 = sbr.rel (0) target = $region49
    $region48: #{res_forward.1} parent=1 // pred_region
      %100 = dma.done [#allocation3], 1024
    $region49: #{res_forward.1} parent=1 // pred_fallthru
      _
    // Predicated region
    $region50: #{res_forward.1} parent=1 // pred_check
      _
    $region51: #{res_forward.1} parent=1 // pred_check_branch
      %102 = sbr.rel (0) target = $region53
    $region52: #{res_forward.1} parent=1 // pred_region
      %104 = dma.done [#allocation6], 1024
    $region53: #{res_forward.1} parent=1 // pred_fallthru
      _
    // Predicated region
    $region54: #{res_forward.1} parent=1 // pred_check
      _
    $region55: #{res_forward.1} parent=1 // pred_check_branch
      %106 = sbr.rel (0) target = $region57
    $region56: #{res_forward.1} parent=1 // pred_region
      %108 = dma.done [#allocation6], 1024
    $region57: #{res_forward.1} parent=1 // pred_fallthru
      _
    // Predicated region
    $region58: #{res_forward.1} parent=1 // pred_check
      _
    $region59: #{res_forward.1} parent=1 // pred_check_branch
      %110 = sbr.rel (0) target = $region61
    $region60: #{res_forward.1} parent=1 // pred_region
      %112 = dma.done [#allocation9], 1024
    $region61: #{res_forward.1} parent=1 // pred_fallthru
      _
    // Predicated region
    $region62: #{res_forward.1} parent=1 // pred_check
      _
    $region63: #{res_forward.1} parent=1 // pred_check_branch
      %114 = sbr.rel (0) target = $region65
    $region64: #{res_forward.1} parent=1 // pred_region
      %116 = dma.done [#allocation9], 1024
    $region65: #{res_forward.1} parent=1 // pred_fallthru
      _
    %v117 = vld [vmem:[%s0] sm:$0xf]
    %v118 = vld [vmem:[#allocation2] sm:$0xf]
    %v119 = vld [vmem:[#allocation2 + $0x4] sm:$0xf]
    %v120 = vld [vmem:[#allocation2 + $0x8] sm:$0xf]
    %v121 = vld [vmem:[#allocation2 + $0xc] sm:$0xf]
    %v122 = vld [vmem:[#allocation2 + $0x10] sm:$0xf]
    %v123 = vld [vmem:[#allocation2 + $0x14] sm:$0xf]
    %v124 = vld [vmem:[#allocation2 + $0x18] sm:$0xf]
    %v125 = vld [vmem:[#allocation2 + $0x1c] sm:$0xf]
    %v126 = vld [vmem:[#allocation2 + $0x20] sm:$0xf]
    %v127 = vld [vmem:[#allocation2 + $0x24] sm:$0xf]
    %v128 = vld [vmem:[#allocation2 + $0x28] sm:$0xf]
    %v129 = vld [vmem:[#allocation2 + $0x2c] sm:$0xf]
    %v130 = vld [vmem:[#allocation2 + $0x30] sm:$0xf]
    %v131 = vld [vmem:[#allocation2 + $0x34] sm:$0xf]
    %v132 = vld [vmem:[#allocation2 + $0x38] sm:$0xf]
    %v133 = vld [vmem:[#allocation2 + $0x3c] sm:$0xf]
    %v134 = vld [vmem:[%s2] sm:$0x1]
    %v136 = vperm.slane %v134, 0
    %v154 = vunpack.c.l.b16 %v118
    %v155 = vunpack.c.l.b16 %v119
    %v156 = vunpack.c.l.b16 %v120
    %v157 = vunpack.c.l.b16 %v121
    %v158 = vunpack.c.l.b16 %v122
    %v159 = vunpack.c.l.b16 %v123
    %v160 = vunpack.c.l.b16 %v124
    %v161 = vunpack.c.l.b16 %v125
    %v162 = vunpack.c.l.b16 %v126
    %v163 = vunpack.c.l.b16 %v127
    %v164 = vunpack.c.l.b16 %v128
    %v165 = vunpack.c.l.b16 %v129
    %v166 = vunpack.c.l.b16 %v130
    %v167 = vunpack.c.l.b16 %v131
    %v168 = vunpack.c.l.b16 %v132
    %v169 = vunpack.c.l.b16 %v133
    %v170 = vpack.c.b16 %v155, %v154
    %v171 = vpack.c.b16 %v157, %v156
    %v172 = vpack.c.b16 %v159, %v158
    %v173 = vpack.c.b16 %v161, %v160
    %v174 = vpack.c.b16 %v163, %v162
    %v175 = vpack.c.b16 %v165, %v164
    %v176 = vpack.c.b16 %v167, %v166
    %v177 = vpack.c.b16 %v169, %v168
    %186 = vmatpush.bf16.msra.mxu0 %v177
    %187 = vmatpush.bf16.msra.mxu0 %v176
    %188 = vmatpush.bf16.msra.mxu0 %v175
    %189 = vmatpush.bf16.msra.mxu0 %v174
    %190 = vmatpush.bf16.msra.mxu0 %v173
    %191 = vmatpush.bf16.msra.mxu0 %v172
    %192 = vmatpush.bf16.msra.mxu0 %v171
    %193 = vmatpush.bf16.msra.mxu0 %v170
    %194 = vmatmul.bf16.gmra.mxu0 %v117
    %v195 = vpop.f32.mrf.mxu0
    %v196 = vadd.f32 %v136, %v195
    %v197 = vpop.f32.mrf.mxu0
    %198 = vdwg.mxu0
    %v199 = vpack.c.bf16 %v196, %v196
    %v200 = vld [vmem:[#allocation5] sm:$0xf]
    %v201 = vld [vmem:[#allocation5 + $0x4] sm:$0xf]
    %v202 = vld [vmem:[#allocation5 + $0x8] sm:$0xf]
    %v203 = vld [vmem:[#allocation5 + $0xc] sm:$0xf]
    %v204 = vld [vmem:[#allocation5 + $0x10] sm:$0xf]
    %v205 = vld [vmem:[#allocation5 + $0x14] sm:$0xf]
    %v206 = vld [vmem:[#allocation5 + $0x18] sm:$0xf]
    %v207 = vld [vmem:[#allocation5 + $0x1c] sm:$0xf]
    %v208 = vld [vmem:[#allocation5 + $0x20] sm:$0xf]
    %v209 = vld [vmem:[#allocation5 + $0x24] sm:$0xf]
    %v210 = vld [vmem:[#allocation5 + $0x28] sm:$0xf]
    %v211 = vld [vmem:[#allocation5 + $0x2c] sm:$0xf]
    %v212 = vld [vmem:[#allocation5 + $0x30] sm:$0xf]
    %v213 = vld [vmem:[#allocation5 + $0x34] sm:$0xf]
    %v214 = vld [vmem:[#allocation5 + $0x38] sm:$0xf]
    %v215 = vld [vmem:[#allocation5 + $0x3c] sm:$0xf]
    %v216 = vld [vmem:[%s4] sm:$0x1]
    %v218 = vperm.slane %v216, 0
    %v236 = vunpack.c.l.b16 %v200
    %v237 = vunpack.c.l.b16 %v201
    %v238 = vunpack.c.l.b16 %v202
    %v239 = vunpack.c.l.b16 %v203
    %v240 = vunpack.c.l.b16 %v204
    %v241 = vunpack.c.l.b16 %v205
    %v242 = vunpack.c.l.b16 %v206
    %v243 = vunpack.c.l.b16 %v207
    %v244 = vunpack.c.l.b16 %v208
    %v245 = vunpack.c.l.b16 %v209
    %v246 = vunpack.c.l.b16 %v210
    %v247 = vunpack.c.l.b16 %v211
    %v248 = vunpack.c.l.b16 %v212
    %v249 = vunpack.c.l.b16 %v213
    %v250 = vunpack.c.l.b16 %v214
    %v251 = vunpack.c.l.b16 %v215
    %v252 = vpack.c.b16 %v237, %v236
    %v253 = vpack.c.b16 %v239, %v238
    %v254 = vpack.c.b16 %v241, %v240
    %v255 = vpack.c.b16 %v243, %v242
    %v256 = vpack.c.b16 %v245, %v244
    %v257 = vpack.c.b16 %v247, %v246
    %v258 = vpack.c.b16 %v249, %v248
    %v259 = vpack.c.b16 %v251, %v250
    %268 = vmatpush.bf16.msra.mxu0 %v259
    %269 = vmatpush.bf16.msra.mxu0 %v258
    %270 = vmatpush.bf16.msra.mxu0 %v257
    %271 = vmatpush.bf16.msra.mxu0 %v256
    %272 = vmatpush.bf16.msra.mxu0 %v255
    %273 = vmatpush.bf16.msra.mxu0 %v254
    %274 = vmatpush.bf16.msra.mxu0 %v253
    %275 = vmatpush.bf16.msra.mxu0 %v252
    %276 = vmatmul.bf16.gmra.mxu0 %v199
    %v277 = vpop.f32.mrf.mxu0
    %v278 = vadd.f32 %v218, %v277
    %v279 = vpop.f32.mrf.mxu0
    %280 = vdwg.mxu0
    %v281 = vmax.f32 %v278, 0.0
    %v282 = vpack.c.bf16 %v281, %v281
    %v283 = vld [vmem:[#allocation7] sm:$0xf]
    %v284 = vld [vmem:[#allocation7 + $0x4] sm:$0xf]
    %v285 = vld [vmem:[#allocation7 + $0x8] sm:$0xf]
    %v286 = vld [vmem:[#allocation7 + $0xc] sm:$0xf]
    %v287 = vld [vmem:[#allocation7 + $0x10] sm:$0xf]
    %v288 = vld [vmem:[#allocation7 + $0x14] sm:$0xf]
    %v289 = vld [vmem:[#allocation7 + $0x18] sm:$0xf]
    %v290 = vld [vmem:[#allocation7 + $0x1c] sm:$0xf]
    %v291 = vld [vmem:[#allocation7 + $0x20] sm:$0xf]
    %v292 = vld [vmem:[#allocation7 + $0x24] sm:$0xf]
    %v293 = vld [vmem:[#allocation7 + $0x28] sm:$0xf]
    %v294 = vld [vmem:[#allocation7 + $0x2c] sm:$0xf]
    %v295 = vld [vmem:[#allocation7 + $0x30] sm:$0xf]
    %v296 = vld [vmem:[#allocation7 + $0x34] sm:$0xf]
    %v297 = vld [vmem:[#allocation7 + $0x38] sm:$0xf]
    %v298 = vld [vmem:[#allocation7 + $0x3c] sm:$0xf]
    %v299 = vld [vmem:[%s6] sm:$0x1]
    %v301 = vperm.slane %v299, 0
    %v319 = vunpack.c.l.b16 %v283
    %v320 = vunpack.c.l.b16 %v284
    %v321 = vunpack.c.l.b16 %v285
    %v322 = vunpack.c.l.b16 %v286
    %v323 = vunpack.c.l.b16 %v287
    %v324 = vunpack.c.l.b16 %v288
    %v325 = vunpack.c.l.b16 %v289
    %v326 = vunpack.c.l.b16 %v290
    %v327 = vunpack.c.l.b16 %v291
    %v328 = vunpack.c.l.b16 %v292
    %v329 = vunpack.c.l.b16 %v293
    %v330 = vunpack.c.l.b16 %v294
    %v331 = vunpack.c.l.b16 %v295
    %v332 = vunpack.c.l.b16 %v296
    %v333 = vunpack.c.l.b16 %v297
    %v334 = vunpack.c.l.b16 %v298
    %v335 = vpack.c.b16 %v320, %v319
    %v336 = vpack.c.b16 %v322, %v321
    %v337 = vpack.c.b16 %v324, %v323
    %v338 = vpack.c.b16 %v326, %v325
    %v339 = vpack.c.b16 %v328, %v327
    %v340 = vpack.c.b16 %v330, %v329
    %v341 = vpack.c.b16 %v332, %v331
    %v342 = vpack.c.b16 %v334, %v333
    %351 = vmatpush.bf16.msra.mxu0 %v342
    %352 = vmatpush.bf16.msra.mxu0 %v341
    %353 = vmatpush.bf16.msra.mxu0 %v340
    %354 = vmatpush.bf16.msra.mxu0 %v339
    %355 = vmatpush.bf16.msra.mxu0 %v338
    %356 = vmatpush.bf16.msra.mxu0 %v337
    %357 = vmatpush.bf16.msra.mxu0 %v336
    %358 = vmatpush.bf16.msra.mxu0 %v335
    %359 = vmatmul.bf16.gmra.mxu0 %v282
    %v360 = vpop.f32.mrf.mxu0
    %v361 = vadd.f32 %v301, %v360
    %v362 = vpop.f32.mrf.mxu0
    %363 = vdwg.mxu0
    %v364 = vmax.f32 %v361, 0.0
    %v365 = vadd.f32 %v196, %v364
    %v366 = vpack.c.bf16 %v365, %v365
    %v367 = vld [vmem:[#allocation8] sm:$0xf]
    %v368 = vld [vmem:[#allocation8 + $0x4] sm:$0xf]
    %v369 = vld [vmem:[#allocation8 + $0x8] sm:$0xf]
    %v370 = vld [vmem:[#allocation8 + $0xc] sm:$0xf]
    %v371 = vld [vmem:[#allocation8 + $0x10] sm:$0xf]
    %v372 = vld [vmem:[#allocation8 + $0x14] sm:$0xf]
    %v373 = vld [vmem:[#allocation8 + $0x18] sm:$0xf]
    %v374 = vld [vmem:[#allocation8 + $0x1c] sm:$0xf]
    %v375 = vld [vmem:[#allocation8 + $0x20] sm:$0xf]
    %v376 = vld [vmem:[#allocation8 + $0x24] sm:$0xf]
    %v377 = vld [vmem:[#allocation8 + $0x28] sm:$0xf]
    %v378 = vld [vmem:[#allocation8 + $0x2c] sm:$0xf]
    %v379 = vld [vmem:[#allocation8 + $0x30] sm:$0xf]
    %v380 = vld [vmem:[#allocation8 + $0x34] sm:$0xf]
    %v381 = vld [vmem:[#allocation8 + $0x38] sm:$0xf]
    %v382 = vld [vmem:[#allocation8 + $0x3c] sm:$0xf]
    %v383 = vld [vmem:[%s8] sm:$0x1]
    %v385 = vperm.slane %v383, 0
    %v403 = vunpack.c.l.b16 %v367
    %v404 = vunpack.c.l.b16 %v368
    %v405 = vunpack.c.l.b16 %v369
    %v406 = vunpack.c.l.b16 %v370
    %v407 = vunpack.c.l.b16 %v371
    %v408 = vunpack.c.l.b16 %v372
    %v409 = vunpack.c.l.b16 %v373
    %v410 = vunpack.c.l.b16 %v374
    %v411 = vunpack.c.l.b16 %v375
    %v412 = vunpack.c.l.b16 %v376
    %v413 = vunpack.c.l.b16 %v377
    %v414 = vunpack.c.l.b16 %v378
    %v415 = vunpack.c.l.b16 %v379
    %v416 = vunpack.c.l.b16 %v380
    %v417 = vunpack.c.l.b16 %v381
    %v418 = vunpack.c.l.b16 %v382
    %v419 = vpack.c.b16 %v404, %v403
    %v420 = vpack.c.b16 %v406, %v405
    %v421 = vpack.c.b16 %v408, %v407
    %v422 = vpack.c.b16 %v410, %v409
    %v423 = vpack.c.b16 %v412, %v411
    %v424 = vpack.c.b16 %v414, %v413
    %v425 = vpack.c.b16 %v416, %v415
    %v426 = vpack.c.b16 %v418, %v417
    %435 = vmatpush.bf16.msra.mxu0 %v426
    %436 = vmatpush.bf16.msra.mxu0 %v425
    %437 = vmatpush.bf16.msra.mxu0 %v424
    %438 = vmatpush.bf16.msra.mxu0 %v423
    %439 = vmatpush.bf16.msra.mxu0 %v422
    %440 = vmatpush.bf16.msra.mxu0 %v421
    %441 = vmatpush.bf16.msra.mxu0 %v420
    %442 = vmatpush.bf16.msra.mxu0 %v419
    %443 = vmatmul.bf16.gmra.mxu0 %v366
    %v444 = vpop.f32.mrf.mxu0
    %v445 = vadd.f32 %v385, %v444
    %v446 = vpop.f32.mrf.mxu0
    %447 = vdwg.mxu0
    %v448 = vmax.f32 %v445, 0.0
    %v449 = vpack.c.bf16 %v448, %v448
    %v450 = vld [vmem:[#allocation10] sm:$0xf]
    %v451 = vld [vmem:[#allocation10 + $0x4] sm:$0xf]
    %v452 = vld [vmem:[#allocation10 + $0x8] sm:$0xf]
    %v453 = vld [vmem:[#allocation10 + $0xc] sm:$0xf]
    %v454 = vld [vmem:[#allocation10 + $0x10] sm:$0xf]
    %v455 = vld [vmem:[#allocation10 + $0x14] sm:$0xf]
    %v456 = vld [vmem:[#allocation10 + $0x18] sm:$0xf]
    %v457 = vld [vmem:[#allocation10 + $0x1c] sm:$0xf]
    %v458 = vld [vmem:[#allocation10 + $0x20] sm:$0xf]
    %v459 = vld [vmem:[#allocation10 + $0x24] sm:$0xf]
    %v460 = vld [vmem:[#allocation10 + $0x28] sm:$0xf]
    %v461 = vld [vmem:[#allocation10 + $0x2c] sm:$0xf]
    %v462 = vld [vmem:[#allocation10 + $0x30] sm:$0xf]
    %v463 = vld [vmem:[#allocation10 + $0x34] sm:$0xf]
    %v464 = vld [vmem:[#allocation10 + $0x38] sm:$0xf]
    %v465 = vld [vmem:[#allocation10 + $0x3c] sm:$0xf]
    %v466 = vld [vmem:[%s10] sm:$0x1]
    %v468 = vperm.slane %v466, 0
    %v486 = vunpack.c.l.b16 %v450
    %v487 = vunpack.c.l.b16 %v451
    %v488 = vunpack.c.l.b16 %v452
    %v489 = vunpack.c.l.b16 %v453
    %v490 = vunpack.c.l.b16 %v454
    %v491 = vunpack.c.l.b16 %v455
    %v492 = vunpack.c.l.b16 %v456
    %v493 = vunpack.c.l.b16 %v457
    %v494 = vunpack.c.l.b16 %v458
    %v495 = vunpack.c.l.b16 %v459
    %v496 = vunpack.c.l.b16 %v460
    %v497 = vunpack.c.l.b16 %v461
    %v498 = vunpack.c.l.b16 %v462
    %v499 = vunpack.c.l.b16 %v463
    %v500 = vunpack.c.l.b16 %v464
    %v501 = vunpack.c.l.b16 %v465
    %v502 = vpack.c.b16 %v487, %v486
    %v503 = vpack.c.b16 %v489, %v488
    %v504 = vpack.c.b16 %v491, %v490
    %v505 = vpack.c.b16 %v493, %v492
    %v506 = vpack.c.b16 %v495, %v494
    %v507 = vpack.c.b16 %v497, %v496
    %v508 = vpack.c.b16 %v499, %v498
    %v509 = vpack.c.b16 %v501, %v500
    %518 = vmatpush.bf16.msra.mxu0 %v509
    %519 = vmatpush.bf16.msra.mxu0 %v508
    %520 = vmatpush.bf16.msra.mxu0 %v507
    %521 = vmatpush.bf16.msra.mxu0 %v506
    %522 = vmatpush.bf16.msra.mxu0 %v505
    %523 = vmatpush.bf16.msra.mxu0 %v504
    %524 = vmatpush.bf16.msra.mxu0 %v503
    %525 = vmatpush.bf16.msra.mxu0 %v502
    %526 = vmatmul.bf16.gmra.mxu0 %v449
    %v527 = vpop.f32.mrf.mxu0
    %v528 = vadd.f32 %v468, %v527
    %v529 = vpop.f32.mrf.mxu0
    %530 = vdwg.mxu0
    %v531 = vmax.f32 %v528, 0.0
    %v532 = vadd.f32 %v365, %v531
    %533 = vst [vmem:[#allocation11] sm:$0xff] %v532
    // Predicated region
    $region66: #{res_forward.1} parent=1 // pred_check
      _
    $region67: #{res_forward.1} parent=1 // pred_check_branch
      %535 = sbr.rel (0) target = $region69
    $region68: #{res_forward.1} parent=1 // pred_region
      %537 = vsyncadd [#allocation4], 0
      %s539 = sshll.u32 [#allocation11], 4
      %s540 = int_to_ptr.vmem [resolvable:$true] %s539
      %s541 = sshll.u32 %s11, 4
      %s542 = int_to_ptr.hbm [resolvable:$true] %s541
      %544 = dma.vmem_to_hbm [thread:$0]  %s540, 128, %s542, [#allocation4]
    $region69: #{res_forward.1} parent=1 // pred_fallthru
      _
    // Predicated region
    $region70: #{res_forward.1} parent=1 // pred_check
      _
    $region71: #{res_forward.1} parent=1 // pred_check_branch
      %546 = sbr.rel (0) target = $region73
    $region72: #{res_forward.1} parent=1 // pred_region
      %548 = dma.done [#allocation4], 128
    $region73: #{res_forward.1} parent=1 // pred_fallthru
      _
    %549 = vsyncpa [#allocation3], 1
    %550 = vsyncpa [#allocation6], 1
    %551 = vsyncpa [#allocation9], 1
    %552 = vsyncpa [#allocation4], 1

</llo_original>
